<compile_context>
chip_gen: v5e
topology: v5e:2x2
jax: 0.10.0
libtpu: 0.0.40
codegen_flags: <defaults>
</compile_context>

<pallas_src>
import jax
import jax.numpy as jnp
from jax.experimental import pallas as pl
from jax.experimental.pallas import tpu as pltpu


def _round_up(a, m):
    return ((a + m - 1) // m) * m


def _linear_kernel(params_ref, x_ref, o_ref):
    # params_ref: SMEM (3,) f32 = [w0, w1, b]
    # x_ref:      VMEM (2, tile_rows, 128) feature-major, lane/sublane dense
    # o_ref:      VMEM (tile_rows, 128)    lane/sublane dense output
    w0 = params_ref[0]
    w1 = params_ref[1]
    b = params_ref[2]
    x0 = x_ref[0].astype(jnp.float32)   # (tile_rows, 128)
    x1 = x_ref[1].astype(jnp.float32)   # (tile_rows, 128)
    o_ref[...] = (x0 * w0 + x1 * w1 + b).astype(o_ref.dtype)


def custom_model_forward(x, weight, bias, *, tile_lanes=512 * 1024,
                         min_pallas_batch=65536):
    """x: (N, 2), weight: (1, 2), bias: (1,) -> (N, 1) float32."""
    n, k = x.shape
    assert k == 2, "CustomModel expects in_features == 2"
    out_f, k2 = weight.shape
    assert out_f == 1 and k2 == 2, "CustomModel expects out_features == 1"

    if n < min_pallas_batch:
        # Fast path: for small batches the pallas_call launch + pipeline
        # overhead dominates by orders of magnitude; a fused XLA op is faster.
        return (x.astype(jnp.float32) @ weight.astype(jnp.float32).T
                + bias.astype(jnp.float32))

    # ------------------------- Pallas path -------------------------
    # Feature-major so each feature is a contiguous lane-dense stream.
    xt = x.T                                   # (2, N)
    n128 = _round_up(n, 128)
    if n128 != n:
        # Pad only to the 128-lane boundary (never to a tile multiple).
        # Padded lanes compute 0*w0 + 0*w1 + b = b and are sliced off below --
        # keep the final [:n] slice if you edit this.
        xt = jnp.pad(xt, ((0, 0), (0, n128 - n)))
    rows = n128 // 128
    xt3 = xt.reshape(2, rows, 128)             # zero-copy (contiguous)

    # Tile the row axis; keep blocks (8,128)-aligned unless they cover the
    # whole array.
    desired_rows = max(8, tile_lanes // 128)
    if desired_rows >= rows:
        tile_rows = rows                       # single full-extent block
    else:
        tile_rows = (desired_rows // 8) * 8
    grid = (pl.cdiv(rows, tile_rows),)

    # Pack weight + bias into one tiny SMEM-resident operand.
    params = jnp.concatenate(
        [weight.reshape(-1), bias.reshape(-1)]
    ).astype(jnp.float32)                      # (3,) = [w0, w1, b]

    cost = pl.CostEstimate(
        flops=4 * n128,                        # 2 mul + 2 add per element
        transcendentals=0,
        bytes_accessed=2 * n128 * 4 + n128 * 4 + 12,
    )

    y2d = pl.pallas_call(
        _linear_kernel,
        out_shape=jax.ShapeDtypeStruct((rows, 128), jnp.float32),
        grid=grid,
        in_specs=[
            pl.BlockSpec(memory_space=pltpu.MemorySpace.SMEM),       # params
            pl.BlockSpec((2, tile_rows, 128), lambda i: (0, i, 0)),  # x
        ],
        out_specs=pl.BlockSpec((tile_rows, 128), lambda i: (i, 0)),
        compiler_params=pltpu.CompilerParams(
            dimension_semantics=("parallel",),
            vmem_limit_bytes=32 * 1024 * 1024,
        ),
        cost_estimate=cost,
    )(params, xt3)

    # (rows, 128) -> (N, 1); drop the lane padding (padded lanes hold just b).
    return y2d.reshape(-1)[:n].reshape(n, 1)


if __name__ == "__main__":
    key = jax.random.PRNGKey(0)
    kx, kw, kb, kx2, kx3 = jax.random.split(key, 5)

    # Deterministic params (mimics PyTorch Linear default U(-1/sqrt(fan_in), .))
    bound = 1.0 / jnp.sqrt(2.0)
    weight = jax.random.uniform(kw, (1, 2), dtype=jnp.float32,
                                minval=-bound, maxval=bound)
    bias = jax.random.uniform(kb, (1,), dtype=jnp.float32,
                              minval=-bound, maxval=bound)

    # 1) Small batch consistent with the module -> fast path.
    x = jax.random.normal(kx, (8, 2), dtype=jnp.float32)
    y = custom_model_forward(x, weight, bias)
    jax.block_until_ready(y)
    assert y.shape == (8, 1)
    assert jnp.allclose(y, x @ weight.T + bias, atol=1e-5), "mismatch (batch=8)"

    # 2) Force the Pallas kernel: 128-aligned batch, small tile -> multi-step grid.
    x2 = jax.random.normal(kx2, (4096, 2), dtype=jnp.float32)
    y2 = custom_model_forward(x2, weight, bias, tile_lanes=1024, min_pallas_batch=0)
    jax.block_until_ready(y2)
    assert y2.shape == (4096, 1)
    assert jnp.allclose(y2, x2 @ weight.T + bias, atol=1e-5), "mismatch (batch=4096)"

    # 3) Force the Pallas kernel: non-128-aligned batch -> exercises lane padding.
    x3 = jax.random.normal(kx3, (1000, 2), dtype=jnp.float32)
    y3 = custom_model_forward(x3, weight, bias, min_pallas_batch=0)
    jax.block_until_ready(y3)
    assert y3.shape == (1000, 1)
    assert jnp.allclose(y3, x3 @ weight.T + bias, atol=1e-5), "mismatch (batch=1000)"

    print("KERNEL_OK")
</pallas_src>

<mosaic_0001>
module attributes {stable_mosaic.version = 11 : i64} {
  func.func @_linear_kernel(%arg0: i32, %arg1: memref<3xf32, #tpu.memory_space<smem>>, %arg2: memref<2x8x128xf32, #tpu.memory_space<vmem>>, %arg3: memref<8x128xf32, #tpu.memory_space<vmem>>) attributes {dimension_semantics = [#tpu.dimension_semantics<parallel>], iteration_bounds = array<i64: 4>, scalar_prefetch = 0 : i64, scratch_operands = 0 : i64, tpu.core_type = #tpu.core_type<tc>, window_params = [{transform_indices = @transform_0, window_bounds = array<i64: 3>}, {transform_indices = @transform_1, window_bounds = array<i64: 2, 8, 128>}, {transform_indices = @transform_2, window_bounds = array<i64: 8, 128>}]} {
    %c0 = arith.constant 0 : index
    %0 = memref.load %arg1[%c0] : memref<3xf32, #tpu.memory_space<smem>>
    %c1 = arith.constant 1 : index
    %1 = memref.load %arg1[%c1] : memref<3xf32, #tpu.memory_space<smem>>
    %c2 = arith.constant 2 : index
    %2 = memref.load %arg1[%c2] : memref<3xf32, #tpu.memory_space<smem>>
    %c0_0 = arith.constant 0 : index
    %c0_1 = arith.constant 0 : index
    %c0_2 = arith.constant 0 : index
    %3 = vector.load %arg2[%c0_0, %c0_1, %c0_2] : memref<2x8x128xf32, #tpu.memory_space<vmem>>, vector<1x8x128xf32>
    %4 = vector.shape_cast %3 : vector<1x8x128xf32> to vector<8x128xf32>
    %c1_3 = arith.constant 1 : index
    %c0_4 = arith.constant 0 : index
    %c0_5 = arith.constant 0 : index
    %5 = vector.load %arg2[%c1_3, %c0_4, %c0_5] : memref<2x8x128xf32, #tpu.memory_space<vmem>>, vector<1x8x128xf32>
    %6 = vector.shape_cast %5 : vector<1x8x128xf32> to vector<8x128xf32>
    %7 = vector.broadcast %0 : f32 to vector<8x128xf32>
    %8 = arith.mulf %4, %7 : vector<8x128xf32>
    %9 = vector.broadcast %1 : f32 to vector<8x128xf32>
    %10 = arith.mulf %6, %9 : vector<8x128xf32>
    %11 = arith.addf %8, %10 : vector<8x128xf32>
    %12 = vector.broadcast %2 : f32 to vector<8x128xf32>
    %13 = arith.addf %11, %12 : vector<8x128xf32>
    %c0_6 = arith.constant 0 : index
    %c0_7 = arith.constant 0 : index
    %14 = vector.load %arg3[%c0_6, %c0_7] : memref<8x128xf32, #tpu.memory_space<vmem>>, vector<8x128xf32>
    tpu.vector_store %arg3[%c0_6, %c0_7], %13 {strides = array<i32>} : memref<8x128xf32, #tpu.memory_space<vmem>>, vector<8x128xf32>,
    return
  }
  func.func @transform_0(%arg0: i32) -> i32 {
    %c0_i32 = arith.constant 0 : i32
    %c0_i32_0 = arith.constant 0 : i32
    return %c0_i32 : i32
  }
  func.func @transform_1(%arg0: i32) -> (i32, i32, i32) {
    %c0_i32 = arith.constant 0 : i32
    %c0_i32_0 = arith.constant 0 : i32
    %c0_i32_1 = arith.constant 0 : i32
    return %c0_i32, %arg0, %c0_i32_0 : i32, i32, i32
  }
  func.func @transform_2(%arg0: i32) -> (i32, i32) {
    %c0_i32 = arith.constant 0 : i32
    %c0_i32_0 = arith.constant 0 : i32
    return %arg0, %c0_i32 : i32, i32
  }
}

</mosaic_0001>

<llo_original>
// kernel: tpu_custom_call.1
$region0: #{tpu_custom_call.1}
  #allocation0 [shape = 'u32[]', space=smem, size = 0x4, offset = 0x4, fixed_abs, tag = 'smem constant byte address 0x4 - core index']
  #allocation1 [shape = 'u32[72,128]{1,0:T(1,128)}', space=vmem, size = 0x9000, scoped, tag = 'internal scratch']
  %s0 = inlined_call_operand.hbm [shape: f32[3], index: 0, kind: input, shape index: {}]
  %s1 = inlined_call_operand.hbm [shape: f32[2,32,128], index: 1, kind: input, shape index: {}]
  %s2 = inlined_call_operand.hbm [shape: f32[32,128], index: 2, kind: output, shape index: {}]
  %s3 = sld [smem:[#allocation0]]
  $region49: #{tpu_custom_call.1} parent=0
    _
  %s5 = ssub.s32 1, %s3
  %s6 = scalar_select 0, %s5, %s3
  $region1: #{tpu_custom_call.1} parent=0
    #allocation2 [shape = 'u8[512]{0}', space=smem, size = 0x200, scoped, tag = 'input window, operand 0, single buffered']
    #allocation3 [shape = 's32[2]{0}', space=sflag, size = 0x8, scoped, tag = 'scoped memory for tpu_custom_call.1']
    #allocation4 [shape = 's32[2]{0}', space=sflag, size = 0x8, scoped, tag = 'scoped memory for tpu_custom_call.1']
    #allocation5 [shape = 's32[2]{0}', space=sflag, size = 0x8, scoped, tag = 'scoped memory for tpu_custom_call.1']
    #allocation6 [shape = 'u8[16384]{0}', space=vmem, size = 0x4000, scoped, tag = 'input window, operand 1']
    #allocation7 [shape = 'u8[8192]{0}', space=vmem, size = 0x2000, scoped, tag = 'output window, operand 0']
    %7 = vsyncpa [#allocation5], 0
    %8 = vsyncpa [#allocation3], 0
    %s9 = scalar_lea.sflag [#allocation3], 1
    %10 = vsyncpa %s9, 0
    %11 = vsyncpa [#allocation4], 0
    %s12 = scalar_lea.sflag [#allocation4], 1
    %13 = vsyncpa %s12, 0
    loop: start=0, step=1, limit=6
    $region2: #{tpu_custom_call.1} parent=1 // loop_pre_header
      _
    $region3: #{tpu_custom_call.1} parent=1 // loop_header
      %s15 = sphi 0, %s19
      %p16 = scmp.ge.s32.totalorder %s15, 6
      %s23 = sphi 0, %s23
      %s25 = sphi 0, %s23
      %s26 = sphi 0, %s25
      %s40 = sphi 0, %s26
      %s46 = sphi 0, %s48
      %s49 = sphi 0, %s46
      %s50 = sphi 0, %s49
      %s66 = sphi 0, %s50
      %s72 = sphi 0, %s74
      %s75 = sphi 0, %s72
      %s76 = sphi 0, %s75
      %s92 = sphi 0, %s76
    $region4: #{tpu_custom_call.1} parent=1 // loop_header_branch
      %18 = sbr.rel (%p16) target = $region8
    $region5: #{tpu_custom_call.1} parent=1 // loop_body
      %s20 = ssub.s32 %s15, 1
      %s21 = ssub.s32 %s15, 2
      %s22 = sadd.s32 %s15, 1
      %s24 = sadd.s32 %s23, 1
      %p27 = scmp.eq.s32.totalorder %s15, 3
      %p28 = scmp.ne.s32.totalorder %s23, %s25
      %p29 = scmp.eq.s32.totalorder %s15, 0
      %p30 = por %p28, %p29
      %p31 = scmp.ne.s32.totalorder %s23, %s25
      %p32 = scmp.eq.s32.totalorder %s20, 3
      %p33 = por %p31, %p32
      %p34 = scmp.ne.s32.totalorder %s25, %s26
      %p35 = scmp.eq.s32.totalorder %s20, 0
      %p36 = por %p34, %p35
      %p37 = scmp.ne.s32.totalorder %s25, %s26
      %p38 = scmp.eq.s32.totalorder %s21, 3
      %p39 = por %p37, %p38
      %p41 = scmp.ne.s32.totalorder %s26, %s40
      %p42 = scmp.eq.s32.totalorder %s21, 0
      %p43 = por %p41, %p42
      %s44 = ssub.s32 %s15, %s22
      %p45 = scmp.eq.s32.totalorder %s44, 0
      %s47 = sadd.s32 %s46, 1
      %s48 = scalar_select %p45, %s46, %s47
      %p51 = pneg %p45
      %p52 = scmp.eq.s32.totalorder %s15, 3
      %p53 = por %p51, %p52
      %p54 = scmp.ne.s32.totalorder %s46, %s49
      %p55 = scmp.eq.s32.totalorder %s15, 0
      %p56 = por %p54, %p55
      %p57 = scmp.ne.s32.totalorder %s46, %s49
      %p58 = scmp.eq.s32.totalorder %s20, 3
      %p59 = por %p57, %p58
      %p60 = scmp.ne.s32.totalorder %s49, %s50
      %p61 = scmp.eq.s32.totalorder %s20, 0
      %p62 = por %p60, %p61
      %p63 = scmp.ne.s32.totalorder %s49, %s50
      %p64 = scmp.eq.s32.totalorder %s21, 3
      %p65 = por %p63, %p64
      %p67 = scmp.ne.s32.totalorder %s50, %s66
      %p68 = scmp.eq.s32.totalorder %s21, 0
      %p69 = por %p67, %p68
      %s70 = ssub.s32 %s15, %s22
      %p71 = scmp.eq.s32.totalorder %s70, 0
      %s73 = sadd.s32 %s72, 1
      %s74 = scalar_select %p71, %s72, %s73
      %p77 = pneg %p71
      %p78 = scmp.eq.s32.totalorder %s15, 3
      %p79 = por %p77, %p78
      %p80 = scmp.ne.s32.totalorder %s72, %s75
      %p81 = scmp.eq.s32.totalorder %s15, 0
      %p82 = por %p80, %p81
      %p83 = scmp.ne.s32.totalorder %s72, %s75
      %p84 = scmp.eq.s32.totalorder %s20, 3
      %p85 = por %p83, %p84
      %p86 = scmp.ne.s32.totalorder %s75, %s76
      %p87 = scmp.eq.s32.totalorder %s20, 0
      %p88 = por %p86, %p87
      %p89 = scmp.ne.s32.totalorder %s75, %s76
      %p90 = scmp.eq.s32.totalorder %s21, 3
      %p91 = por %p89, %p90
      %p93 = scmp.ne.s32.totalorder %s76, %s92
      %p94 = scmp.eq.s32.totalorder %s21, 0
      %p95 = por %p93, %p94
      %p96 = scmp.le.s32.totalorder 1, %s15
      %p97 = scmp.lt.s32.totalorder %s15, 5
      %p98 = pnand %p96, %p97
      %p99 = pneg %p98
      // Predicated region
      $region9: #{tpu_custom_call.1} parent=5 // pred_check
        _
      $region10: #{tpu_custom_call.1} parent=5 // pred_check_branch
        %101 = sbr.rel (%p98) target = $region12
      $region11: #{tpu_custom_call.1} parent=5 // pred_region
        %s102 = ssub.s32 %s15, 1
        // Predicated region
        $region13: #{tpu_custom_call.1} parent=11 // pred_check
          %p103 = pneg %p36
        $region14: #{tpu_custom_call.1} parent=11 // pred_check_branch
          %105 = sbr.rel (%p103) target = $region16
        $region15: #{tpu_custom_call.1} parent=11 // pred_region
          %107 = vsyncadd [#allocation5], 0
          %s109 = sshll.u32 %s0, 4
          %s110 = int_to_ptr.hbm [resolvable:$true] %s109
          %112 = dma.hbm_to_smem %s110, 16, [#allocation2], [#allocation5]
        $region16: #{tpu_custom_call.1} parent=11 // pred_fallthru
          _
      $region12: #{tpu_custom_call.1} parent=5 // pred_fallthru
        _
      %p113 = scmp.lt.s32.totalorder %s15, 4
      // Predicated region
      $region17: #{tpu_custom_call.1} parent=5 // pred_check
        %p114 = pneg %p113
      $region18: #{tpu_custom_call.1} parent=5 // pred_check_branch
        %116 = sbr.rel (%p114) target = $region20
      $region19: #{tpu_custom_call.1} parent=5 // pred_region
        // Predicated region
        $region21: #{tpu_custom_call.1} parent=19 // pred_check
          %p117 = pneg %p56
        $region22: #{tpu_custom_call.1} parent=19 // pred_check_branch
          %119 = sbr.rel (%p117) target = $region24
        $region23: #{tpu_custom_call.1} parent=19 // pred_region
          %s120 = sand.u32 %s46, 1
          %s121 = scalar_lea.sflag [#allocation3], %s120
          %s122 = sand.u32 %s46, 1
          %s123 = smul.addr %s122, 16
          %s124 = scalar_lea.vmem [#allocation6], %s123
          %126 = vsyncadd %s121, 0
          %s127 = smul.addr %s15, 8
          %s128 = scalar_lea.hbm %s1, %s127
          %s129 = sshll.u32 %s128, 4
          %s130 = int_to_ptr.hbm [resolvable:$true] %s129
          %s131 = sshll.u32 %s124, 4
          %s132 = int_to_ptr.vmem [resolvable:$true] %s131
          %137 = dma.hbm_to_vmem [thread:$0]  %s130, 256, %s132, %s121, 512, 128, 8
        $region24: #{tpu_custom_call.1} parent=19 // pred_fallthru
          _
      $region20: #{tpu_custom_call.1} parent=5 // pred_fallthru
        _
      %p138 = scmp.le.s32.totalorder 1, %s15
      %p139 = scmp.lt.s32.totalorder %s15, 5
      %p140 = pnand %p138, %p139
      %p141 = pneg %p140
      // Predicated region
      $region25: #{tpu_custom_call.1} parent=5 // pred_check
        _
      $region26: #{tpu_custom_call.1} parent=5 // pred_check_branch
        %143 = sbr.rel (%p140) target = $region28
      $region27: #{tpu_custom_call.1} parent=5 // pred_region
        %s144 = ssub.s32 %s15, 1
        // Predicated region
        $region29: #{tpu_custom_call.1} parent=27 // pred_check
          %p145 = pneg %p36
        $region30: #{tpu_custom_call.1} parent=27 // pred_check_branch
          %147 = sbr.rel (%p145) target = $region32
        $region31: #{tpu_custom_call.1} parent=27 // pred_region
          %149 = dma.done [#allocation5], 16
        $region32: #{tpu_custom_call.1} parent=27 // pred_fallthru
          _
        %s150 = sand.u32 %s49, 1
        %s151 = scalar_lea.sflag [#allocation3], %s150
        %s152 = sand.u32 %s49, 1
        %s153 = smul.addr %s152, 16
        %s154 = scalar_lea.vmem [#allocation6], %s153
        // Predicated region
        $region33: #{tpu_custom_call.1} parent=27 // pred_check
          %p155 = pneg %p62
        $region34: #{tpu_custom_call.1} parent=27 // pred_check_branch
          %157 = sbr.rel (%p155) target = $region36
        $region35: #{tpu_custom_call.1} parent=27 // pred_region
          %159 = dma.done %s151, 256
        $region36: #{tpu_custom_call.1} parent=27 // pred_fallthru
          _
        %160 = sfence
        %p161 = pneg %p36
        %p162 = pneg %p33
        %s163 = sand.u32 %s49, 1
        %s164 = scalar_lea.sflag [#allocation3], %s163
        %s165 = sand.u32 %s49, 1
        %s166 = smul.addr %s165, 16
        %s167 = scalar_lea.vmem [#allocation6], %s166
        %p168 = pneg %p62
        %p169 = pneg %p59
        %p170 = pneg %p88
        %p171 = pneg %p85
        %s172 = sand.u32 %s75, 1
        %s173 = scalar_lea.sflag [#allocation4], %s172
        %s174 = sand.u32 %s75, 1
        %s175 = smul.addr %s174, 8
        %s176 = scalar_lea.vmem [#allocation7], %s175
        %s177 = sld [smem:[#allocation2]]
        %s178 = sld [smem:[#allocation2 + $0x1]]
        %s179 = sld [smem:[#allocation2 + $0x2]]
        %v180 = vld [vmem:[%s154] sm:$0xff]
        %s181 = scalar_lea.vmem %s154, 8 [#allocation6]
        %v182 = vld [vmem:[%s181] sm:$0xff]
        %v183 = vstv %s177
        %v184 = vmul.f32 %v180, %v183
        %v185 = vstv %s178
        %v186 = vmul.f32 %v182, %v185
        %v187 = vadd.f32 %v184, %v186
        %v188 = vstv %s179
        %v189 = vadd.f32 %v187, %v188
        %190 = vst [vmem:[%s176] sm:$0xff] %v189
        %s191 = sand.u32 %s75, 1
        %s192 = scalar_lea.sflag [#allocation4], %s191
        %s193 = sand.u32 %s75, 1
        %s194 = smul.addr %s193, 8
        %s195 = scalar_lea.vmem [#allocation7], %s194
        // Predicated region
        $region37: #{tpu_custom_call.1} parent=27 // pred_check
          %p196 = pneg %p85
        $region38: #{tpu_custom_call.1} parent=27 // pred_check_branch
          %198 = sbr.rel (%p196) target = $region40
        $region39: #{tpu_custom_call.1} parent=27 // pred_region
          %200 = vsyncadd %s192, 0
          %s201 = smul.addr %s20, 8
          %s202 = scalar_lea.hbm %s2, %s201
          %s204 = sshll.u32 %s195, 4
          %s205 = int_to_ptr.vmem [resolvable:$true] %s204
          %s206 = sshll.u32 %s202, 4
          %s207 = int_to_ptr.hbm [resolvable:$true] %s206
          %209 = dma.vmem_to_hbm [thread:$0]  %s205, 128, %s207, %s192
        $region40: #{tpu_custom_call.1} parent=27 // pred_fallthru
          _
      $region28: #{tpu_custom_call.1} parent=5 // pred_fallthru
        _
      %p210 = scmp.le.s32.totalorder 2, %s15
      // Predicated region
      $region41: #{tpu_custom_call.1} parent=5 // pred_check
        %p211 = pneg %p210
      $region42: #{tpu_custom_call.1} parent=5 // pred_check_branch
        %213 = sbr.rel (%p211) target = $region44
      $region43: #{tpu_custom_call.1} parent=5 // pred_region
        %s214 = ssub.s32 %s15, 2
        // Predicated region
        $region45: #{tpu_custom_call.1} parent=43 // pred_check
          %p215 = pneg %p91
        $region46: #{tpu_custom_call.1} parent=43 // pred_check_branch
          %217 = sbr.rel (%p215) target = $region48
        $region47: #{tpu_custom_call.1} parent=43 // pred_region
          %s218 = sand.u32 %s76, 1
          %s219 = scalar_lea.sflag [#allocation4], %s218
          %s220 = sand.u32 %s76, 1
          %s221 = smul.addr %s220, 8
          %s222 = scalar_lea.vmem [#allocation7], %s221
          %224 = dma.done %s219, 128
        $region48: #{tpu_custom_call.1} parent=43 // pred_fallthru
          _
      $region44: #{tpu_custom_call.1} parent=5 // pred_fallthru
        _
    $region6: #{tpu_custom_call.1} parent=1 // loop_footer
      %s19 = sadd.s32 1, %s15
    $region7: #{tpu_custom_call.1} parent=1 // loop_footer_branch
      %14 = sbr.rel target = $region3
    $region8: #{tpu_custom_call.1} parent=1 // loop_exit
      _
    %225 = vsyncpa [#allocation3], 1
    %s226 = scalar_lea.sflag [#allocation3], 1
    %227 = vsyncpa %s226, 1
    %228 = vsyncpa [#allocation4], 1
    %s229 = scalar_lea.sflag [#allocation4], 1
    %230 = vsyncpa %s229, 1
    %231 = vsyncpa [#allocation5], 1
    %s232 = scalar_lea.sflag [#allocation5], 1
    %233 = vsyncpa %s232, 1

</llo_original>
